<compile_context>
chip_gen: v5e
topology: v5e:2x2
jax: 0.10.0
libtpu: 0.0.40
codegen_flags: <defaults>
</compile_context>

<pallas_src>
import jax
import jax.numpy as jnp
from jax import lax
from jax.experimental import pallas as pl
from jax.experimental.pallas import tpu as pltpu


def classifier_kernel(x_ref,
                      w1_ref, b1_ref, w2_ref, b2_ref,
                      w3_ref, b3_ref, w4_ref, b4_ref,
                      o_ref):
    """One batch tile.  x_ref: [bm, D] f32 (batch-major), o_ref: [C, bm] f32."""

    def dense(w_ref, b_ref, h):
        # [out, in] @ [in, bm] -> [out, bm]; bf16 operands, f32 accumulation.
        return jnp.dot(w_ref[...], h, preferred_element_type=jnp.float32) + b_ref[...]

    xb = x_ref[...].astype(jnp.bfloat16)                               # [bm, D]
    # Layer 1: contract x's last dim with W1's last dim -> feature-major
    # activation [32, bm]; the relayout rides the MXU instead of a wrapper op.
    h = lax.dot_general(w1_ref[...], xb, (((1,), (1,)), ((), ())),
                        preferred_element_type=jnp.float32) + b1_ref[...]
    h = jnp.maximum(h, 0.0).astype(jnp.bfloat16)
    h = jnp.maximum(dense(w2_ref, b2_ref, h), 0.0).astype(jnp.bfloat16)
    h = jnp.maximum(dense(w3_ref, b3_ref, h), 0.0).astype(jnp.bfloat16)
    o_ref[...] = dense(w4_ref, b4_ref, h).astype(o_ref.dtype)          # logits


def _num_tensorcores():
    """Best-effort: 2 on v7x (two TensorCores/chip), 1 on v5e/v6e."""
    try:
        kind = jax.devices()[0].device_kind.lower().replace(" ", "")
    except Exception:
        return 1
    return 2 if ("v7" in kind or "tpu7" in kind) else 1


def _pick_batch_tile(B, num_tc, bm_max):
    """Batch tile (128-lane multiple) giving a ~num_tc-multiple of grid steps."""
    per_core = int(pl.cdiv(B, num_tc))
    n_blocks = max(num_tc, num_tc * int(pl.cdiv(per_core, bm_max)))
    bm = 128 * int(pl.cdiv(int(pl.cdiv(B, n_blocks)), 128))
    bm = max(128, min(bm, bm_max))
    if bm >= B:            # one full-array block: grid=1, no block > array dims
        bm = int(B)
    return bm


def classifier_forward(x, params, *, bm_max=None):
    """x: [B, D] float32.  params: 4 x (W [out, in], b [out]) in PyTorch layout."""
    B, D = x.shape
    C = params[-1][0].shape[0]

    num_tc = _num_tensorcores()
    if bm_max is None:
        # v7x: larger tiles are free (footprint << 64 MiB VMEM); v5e/v6e: 512
        # keeps the f32 [128, bm] intermediate near the vreg file (store BW).
        bm_max = 1024 if num_tc == 2 else 512
    bm = _pick_batch_tile(B, num_tc, bm_max)
    grid = int(pl.cdiv(B, bm))

    flat = []
    for w, b in params:
        flat.append(w.astype(jnp.bfloat16))                  # [out, in]
        flat.append(b.astype(jnp.float32).reshape(-1, 1))    # [out, 1] f32 bias add

    in_specs = [pl.BlockSpec((bm, D), lambda i: (i, 0))]      # ragged last tile OK
    for arr in flat:
        # Tiny whole-array weight/bias blocks, constant across the grid.
        # TODO(synk): pipeline_mode=pl.Buffered(1) would drop the unused second
        # pipeline buffer (~66 KB VMEM); skipped since it is noise at this size.
        in_specs.append(pl.BlockSpec(arr.shape, lambda i: (0, 0)))

    flops = 2 * B * sum(int(w.shape[0]) * int(w.shape[1]) for w, _ in params)
    bytes_accessed = (B * D * 4 + B * C * 4
                      + sum(int(a.size) * a.dtype.itemsize for a in flat))

    out_t = pl.pallas_call(
        classifier_kernel,
        out_shape=jax.ShapeDtypeStruct((C, B), jnp.float32),
        grid_spec=pltpu.PrefetchScalarGridSpec(
            num_scalar_prefetch=0,
            grid=(grid,),
            in_specs=in_specs,
            out_specs=pl.BlockSpec((C, bm), lambda i: (0, i)),
        ),
        compiler_params=pltpu.CompilerParams(
            dimension_semantics=("parallel",),
        ),
        cost_estimate=pl.CostEstimate(
            flops=flops, transcendentals=0, bytes_accessed=bytes_accessed),
    )(x, *flat)

    # Tiny (C, B) -> (B, C) relayout; stays inside the same jit as the kernel.
    return out_t.T


def init_params(key, dims):
    """PyTorch-layout params: W [out, in] ~ N(0, 1/sqrt(in)), b [out] small."""
    params = []
    for din, dout in zip(dims[:-1], dims[1:]):
        key, kw, kb = jax.random.split(key, 3)
        w = jax.random.normal(kw, (dout, din), jnp.float32) / jnp.sqrt(float(din))
        b = 0.1 * jax.random.normal(kb, (dout,), jnp.float32)
        params.append((w, b))
    return params


def classifier_reference(x, params):
    """Same precision path as the kernel: bf16 operands, f32 accumulation."""
    h = x.astype(jnp.bfloat16)
    for i, (w, b) in enumerate(params):
        h = jnp.dot(h, w.T.astype(jnp.bfloat16),
                    preferred_element_type=jnp.float32) + b
        if i < len(params) - 1:
            h = jnp.maximum(h, 0.0).astype(jnp.bfloat16)
    return h


if __name__ == "__main__":
    key = jax.random.PRNGKey(0)
    kx, kp = jax.random.split(key)

    # Houston-2013-like shapes kept small: 144 spectral bands, 15 classes.
    # B deliberately not a multiple of the tile to exercise the ragged grid.
    B, D, C = 200, 144, 15
    x = jax.random.normal(kx, (B, D), jnp.float32)

    dims = (D, 32, 64, 128, C)
    params = init_params(kp, dims)

    fwd = jax.jit(classifier_forward)
    out = jax.block_until_ready(fwd(x, params))
    ref = classifier_reference(x, params)

    assert out.shape == (B, C)
    assert jnp.allclose(out, ref, atol=1e-2, rtol=1e-2), "mismatch vs reference"

    print("KERNEL_OK")
</pallas_src>

<mosaic_0001>
module attributes {stable_mosaic.version = 11 : i64} {
  func.func @classifier_kernel(%arg0: i32, %arg1: memref<200x144xf32, #tpu.memory_space<vmem>>, %arg2: memref<32x144xbf16, #tpu.memory_space<vmem>>, %arg3: memref<32x1xf32, #tpu.memory_space<vmem>>, %arg4: memref<64x32xbf16, #tpu.memory_space<vmem>>, %arg5: memref<64x1xf32, #tpu.memory_space<vmem>>, %arg6: memref<128x64xbf16, #tpu.memory_space<vmem>>, %arg7: memref<128x1xf32, #tpu.memory_space<vmem>>, %arg8: memref<15x128xbf16, #tpu.memory_space<vmem>>, %arg9: memref<15x1xf32, #tpu.memory_space<vmem>>, %arg10: memref<15x200xf32, #tpu.memory_space<vmem>>) attributes {dimension_semantics = [#tpu.dimension_semantics<parallel>], iteration_bounds = array<i64: 1>, scalar_prefetch = 0 : i64, scratch_operands = 0 : i64, tpu.core_type = #tpu.core_type<tc>, window_params = [{transform_indices = @transform_0, window_bounds = array<i64: 200, 144>}, {pipeline_mode = #tpu.pipeline_mode<synchronous>, transform_indices = @transform_1, window_bounds = array<i64: 32, 144>}, {pipeline_mode = #tpu.pipeline_mode<synchronous>, transform_indices = @transform_2, window_bounds = array<i64: 32, 1>}, {pipeline_mode = #tpu.pipeline_mode<synchronous>, transform_indices = @transform_3, window_bounds = array<i64: 64, 32>}, {pipeline_mode = #tpu.pipeline_mode<synchronous>, transform_indices = @transform_4, window_bounds = array<i64: 64, 1>}, {pipeline_mode = #tpu.pipeline_mode<synchronous>, transform_indices = @transform_5, window_bounds = array<i64: 128, 64>}, {pipeline_mode = #tpu.pipeline_mode<synchronous>, transform_indices = @transform_6, window_bounds = array<i64: 128, 1>}, {pipeline_mode = #tpu.pipeline_mode<synchronous>, transform_indices = @transform_7, window_bounds = array<i64: 15, 128>}, {pipeline_mode = #tpu.pipeline_mode<synchronous>, transform_indices = @transform_8, window_bounds = array<i64: 15, 1>}, {transform_indices = @transform_9, window_bounds = array<i64: 15, 200>}]} {
    %c0 = arith.constant 0 : index
    %c0_0 = arith.constant 0 : index
    %0 = vector.load %arg1[%c0, %c0_0] : memref<200x144xf32, #tpu.memory_space<vmem>>, vector<200x144xf32>
    %1 = arith.truncf %0 : vector<200x144xf32> to vector<200x144xbf16>
    %c0_1 = arith.constant 0 : index
    %c0_2 = arith.constant 0 : index
    %2 = vector.load %arg2[%c0_1, %c0_2] : memref<32x144xbf16, #tpu.memory_space<vmem>>, vector<32x144xbf16>
    %cst = arith.constant dense<0.000000e+00> : vector<32x200xf32>
    %3 = tpu.matmul %2, %1, %cst {dimension_numbers = #tpu.dot_dimension_numbers<[1], [1], [0], [0], [0, 0, 1, 0], [], []>} : vector<32x144xbf16>, vector<200x144xbf16>, vector<32x200xf32> -> vector<32x200xf32>
    %c0_3 = arith.constant 0 : index
    %c0_4 = arith.constant 0 : index
    %4 = vector.load %arg3[%c0_3, %c0_4] : memref<32x1xf32, #tpu.memory_space<vmem>>, vector<32x1xf32>
    %5 = vector.broadcast %4 : vector<32x1xf32> to vector<32x200xf32>
    %6 = arith.addf %3, %5 : vector<32x200xf32>
    %cst_5 = arith.constant 0.000000e+00 : f32
    %7 = vector.broadcast %cst_5 : f32 to vector<32x200xf32>
    %8 = arith.maximumf %6, %7 : vector<32x200xf32>
    %9 = arith.truncf %8 : vector<32x200xf32> to vector<32x200xbf16>
    %c0_6 = arith.constant 0 : index
    %c0_7 = arith.constant 0 : index
    %10 = vector.load %arg4[%c0_6, %c0_7] : memref<64x32xbf16, #tpu.memory_space<vmem>>, vector<64x32xbf16>
    %cst_8 = arith.constant dense<0.000000e+00> : vector<64x200xf32>
    %11 = tpu.matmul %10, %9, %cst_8 {dimension_numbers = #tpu.dot_dimension_numbers<[1], [0], [0], [1], [0, 0, 1, 1], [], []>} : vector<64x32xbf16>, vector<32x200xbf16>, vector<64x200xf32> -> vector<64x200xf32>
    %c0_9 = arith.constant 0 : index
    %c0_10 = arith.constant 0 : index
    %12 = vector.load %arg5[%c0_9, %c0_10] : memref<64x1xf32, #tpu.memory_space<vmem>>, vector<64x1xf32>
    %13 = vector.broadcast %12 : vector<64x1xf32> to vector<64x200xf32>
    %14 = arith.addf %11, %13 : vector<64x200xf32>
    %cst_11 = arith.constant 0.000000e+00 : f32
    %15 = vector.broadcast %cst_11 : f32 to vector<64x200xf32>
    %16 = arith.maximumf %14, %15 : vector<64x200xf32>
    %17 = arith.truncf %16 : vector<64x200xf32> to vector<64x200xbf16>
    %c0_12 = arith.constant 0 : index
    %c0_13 = arith.constant 0 : index
    %18 = vector.load %arg6[%c0_12, %c0_13] : memref<128x64xbf16, #tpu.memory_space<vmem>>, vector<128x64xbf16>
    %cst_14 = arith.constant dense<0.000000e+00> : vector<128x200xf32>
    %19 = tpu.matmul %18, %17, %cst_14 {dimension_numbers = #tpu.dot_dimension_numbers<[1], [0], [0], [1], [0, 0, 1, 1], [], []>} : vector<128x64xbf16>, vector<64x200xbf16>, vector<128x200xf32> -> vector<128x200xf32>
    %c0_15 = arith.constant 0 : index
    %c0_16 = arith.constant 0 : index
    %20 = vector.load %arg7[%c0_15, %c0_16] : memref<128x1xf32, #tpu.memory_space<vmem>>, vector<128x1xf32>
    %21 = vector.broadcast %20 : vector<128x1xf32> to vector<128x200xf32>
    %22 = arith.addf %19, %21 : vector<128x200xf32>
    %cst_17 = arith.constant 0.000000e+00 : f32
    %23 = vector.broadcast %cst_17 : f32 to vector<128x200xf32>
    %24 = arith.maximumf %22, %23 : vector<128x200xf32>
    %25 = arith.truncf %24 : vector<128x200xf32> to vector<128x200xbf16>
    %c0_18 = arith.constant 0 : index
    %c0_19 = arith.constant 0 : index
    %26 = vector.load %arg8[%c0_18, %c0_19] : memref<15x128xbf16, #tpu.memory_space<vmem>>, vector<15x128xbf16>
    %cst_20 = arith.constant dense<0.000000e+00> : vector<15x200xf32>
    %27 = tpu.matmul %26, %25, %cst_20 {dimension_numbers = #tpu.dot_dimension_numbers<[1], [0], [0], [1], [0, 0, 1, 1], [], []>} : vector<15x128xbf16>, vector<128x200xbf16>, vector<15x200xf32> -> vector<15x200xf32>
    %c0_21 = arith.constant 0 : index
    %c0_22 = arith.constant 0 : index
    %28 = vector.load %arg9[%c0_21, %c0_22] : memref<15x1xf32, #tpu.memory_space<vmem>>, vector<15x1xf32>
    %29 = vector.broadcast %28 : vector<15x1xf32> to vector<15x200xf32>
    %30 = arith.addf %27, %29 : vector<15x200xf32>
    %c0_23 = arith.constant 0 : index
    %c0_24 = arith.constant 0 : index
    %31 = vector.load %arg10[%c0_23, %c0_24] : memref<15x200xf32, #tpu.memory_space<vmem>>, vector<15x200xf32>
    tpu.vector_store %arg10[%c0_23, %c0_24], %30 {strides = array<i32>} : memref<15x200xf32, #tpu.memory_space<vmem>>, vector<15x200xf32>,
    return
  }
  func.func @transform_0(%arg0: i32) -> (i32, i32) {
    %c0_i32 = arith.constant 0 : i32
    %c0_i32_0 = arith.constant 0 : i32
    return %arg0, %c0_i32 : i32, i32
  }
  func.func @transform_1(%arg0: i32) -> (i32, i32) {
    %c0_i32 = arith.constant 0 : i32
    %c0_i32_0 = arith.constant 0 : i32
    %c0_i32_1 = arith.constant 0 : i32
    return %c0_i32, %c0_i32_0 : i32, i32
  }
  func.func @transform_2(%arg0: i32) -> (i32, i32) {
    %c0_i32 = arith.constant 0 : i32
    %c0_i32_0 = arith.constant 0 : i32
    %c0_i32_1 = arith.constant 0 : i32
    return %c0_i32, %c0_i32_0 : i32, i32
  }
  func.func @transform_3(%arg0: i32) -> (i32, i32) {
    %c0_i32 = arith.constant 0 : i32
    %c0_i32_0 = arith.constant 0 : i32
    %c0_i32_1 = arith.constant 0 : i32
    return %c0_i32, %c0_i32_0 : i32, i32
  }
  func.func @transform_4(%arg0: i32) -> (i32, i32) {
    %c0_i32 = arith.constant 0 : i32
    %c0_i32_0 = arith.constant 0 : i32
    %c0_i32_1 = arith.constant 0 : i32
    return %c0_i32, %c0_i32_0 : i32, i32
  }
  func.func @transform_5(%arg0: i32) -> (i32, i32) {
    %c0_i32 = arith.constant 0 : i32
    %c0_i32_0 = arith.constant 0 : i32
    %c0_i32_1 = arith.constant 0 : i32
    return %c0_i32, %c0_i32_0 : i32, i32
  }
  func.func @transform_6(%arg0: i32) -> (i32, i32) {
    %c0_i32 = arith.constant 0 : i32
    %c0_i32_0 = arith.constant 0 : i32
    %c0_i32_1 = arith.constant 0 : i32
    return %c0_i32, %c0_i32_0 : i32, i32
  }
  func.func @transform_7(%arg0: i32) -> (i32, i32) {
    %c0_i32 = arith.constant 0 : i32
    %c0_i32_0 = arith.constant 0 : i32
    %c0_i32_1 = arith.constant 0 : i32
    return %c0_i32, %c0_i32_0 : i32, i32
  }
  func.func @transform_8(%arg0: i32) -> (i32, i32) {
    %c0_i32 = arith.constant 0 : i32
    %c0_i32_0 = arith.constant 0 : i32
    %c0_i32_1 = arith.constant 0 : i32
    return %c0_i32, %c0_i32_0 : i32, i32
  }
  func.func @transform_9(%arg0: i32) -> (i32, i32) {
    %c0_i32 = arith.constant 0 : i32
    %c0_i32_0 = arith.constant 0 : i32
    return %c0_i32, %arg0 : i32, i32
  }
}

</mosaic_0001>

<llo_original>
// kernel: classifier_forward.1
$region0: #{classifier_forward.1}
  #allocation0 [shape = 'u32[]', space=smem, size = 0x4, offset = 0x4, fixed_abs, tag = 'smem constant byte address 0x4 - core index']
  #allocation1 [shape = 'u32[72,128]{1,0:T(1,128)}', space=vmem, size = 0x9000, scoped, tag = 'internal scratch']
  %s0 = inlined_call_operand.vmem [shape: f32[200,144], index: 0, kind: input, shape index: {}]
  %s1 = inlined_call_operand.vmem [shape: bf16[32,144], index: 1, kind: input, shape index: {}]
  %s2 = inlined_call_operand.vmem [shape: f32[32,1], index: 2, kind: input, shape index: {}]
  %s3 = inlined_call_operand.vmem [shape: bf16[64,32], index: 3, kind: input, shape index: {}]
  %s4 = inlined_call_operand.vmem [shape: f32[64,1], index: 4, kind: input, shape index: {}]
  %s5 = inlined_call_operand.vmem [shape: bf16[128,64], index: 5, kind: input, shape index: {}]
  %s6 = inlined_call_operand.vmem [shape: f32[128,1], index: 6, kind: input, shape index: {}]
  %s7 = inlined_call_operand.vmem [shape: bf16[15,128], index: 7, kind: input, shape index: {}]
  %s8 = inlined_call_operand.vmem [shape: f32[15,1], index: 8, kind: input, shape index: {}]
  %s9 = inlined_call_operand.hbm [shape: f32[15,200], index: 9, kind: output, shape index: {}]
  %s10 = sld [smem:[#allocation0]]
  $region46: #{classifier_forward.1} parent=0
    _
  %s12 = ssub.s32 1, %s10
  %s13 = scalar_select 0, %s12, %s10
  $region1: #{classifier_forward.1} parent=0
    #allocation2 [shape = 'u8[16384]{0}', space=vmem, size = 0x4000, scoped, tag = 'output window, operand 0, single buffered']
    #allocation3 [shape = 's32[1]{0}', space=sflag, size = 0x4, scoped, tag = 'scoped memory for classifier_forward.1']
    %14 = vsyncpa [#allocation3], 0
    // Predicated region
    $region2: #{classifier_forward.1} parent=1 // pred_check
      _
    $region3: #{classifier_forward.1} parent=1 // pred_check_branch
      %16 = sbr.rel (0) target = $region5
    $region4: #{classifier_forward.1} parent=1 // pred_region
      _
    $region5: #{classifier_forward.1} parent=1 // pred_fallthru
      _
    // Predicated region
    $region6: #{classifier_forward.1} parent=1 // pred_check
      _
    $region7: #{classifier_forward.1} parent=1 // pred_check_branch
      %18 = sbr.rel (0) target = $region9
    $region8: #{classifier_forward.1} parent=1 // pred_region
      _
    $region9: #{classifier_forward.1} parent=1 // pred_fallthru
      _
    // Predicated region
    $region10: #{classifier_forward.1} parent=1 // pred_check
      _
    $region11: #{classifier_forward.1} parent=1 // pred_check_branch
      %20 = sbr.rel (0) target = $region13
    $region12: #{classifier_forward.1} parent=1 // pred_region
      _
    $region13: #{classifier_forward.1} parent=1 // pred_fallthru
      _
    // Predicated region
    $region14: #{classifier_forward.1} parent=1 // pred_check
      _
    $region15: #{classifier_forward.1} parent=1 // pred_check_branch
      %22 = sbr.rel (0) target = $region17
    $region16: #{classifier_forward.1} parent=1 // pred_region
      _
    $region17: #{classifier_forward.1} parent=1 // pred_fallthru
      _
    // Predicated region
    $region18: #{classifier_forward.1} parent=1 // pred_check
      _
    $region19: #{classifier_forward.1} parent=1 // pred_check_branch
      %24 = sbr.rel (0) target = $region21
    $region20: #{classifier_forward.1} parent=1 // pred_region
      _
    $region21: #{classifier_forward.1} parent=1 // pred_fallthru
      _
    // Predicated region
    $region22: #{classifier_forward.1} parent=1 // pred_check
      _
    $region23: #{classifier_forward.1} parent=1 // pred_check_branch
      %26 = sbr.rel (0) target = $region25
    $region24: #{classifier_forward.1} parent=1 // pred_region
      _
    $region25: #{classifier_forward.1} parent=1 // pred_fallthru
      _
    // Predicated region
    $region26: #{classifier_forward.1} parent=1 // pred_check
      _
    $region27: #{classifier_forward.1} parent=1 // pred_check_branch
      %28 = sbr.rel (0) target = $region29
    $region28: #{classifier_forward.1} parent=1 // pred_region
      _
    $region29: #{classifier_forward.1} parent=1 // pred_fallthru
      _
    // Predicated region
    $region30: #{classifier_forward.1} parent=1 // pred_check
      _
    $region31: #{classifier_forward.1} parent=1 // pred_check_branch
      %30 = sbr.rel (0) target = $region33
    $region32: #{classifier_forward.1} parent=1 // pred_region
      _
    $region33: #{classifier_forward.1} parent=1 // pred_fallthru
      _
    // Predicated region
    $region34: #{classifier_forward.1} parent=1 // pred_check
      _
    $region35: #{classifier_forward.1} parent=1 // pred_check_branch
      %32 = sbr.rel (0) target = $region37
    $region36: #{classifier_forward.1} parent=1 // pred_region
      _
    $region37: #{classifier_forward.1} parent=1 // pred_fallthru
      _
    %v34 = vld [vmem:[%s0] sm:$0xff]
    %v35 = vld [vmem:[%s0 + $0x8] sm:$0xff]
    %v36 = vld [vmem:[%s0 + $0x10] sm:$0xff]
    %v37 = vld [vmem:[%s0 + $0x18] sm:$0xff]
    %v38 = vld [vmem:[%s0 + $0x20] sm:$0xff]
    %v39 = vld [vmem:[%s0 + $0x28] sm:$0xff]
    %v40 = vld [vmem:[%s0 + $0x30] sm:$0xff]
    %v41 = vld [vmem:[%s0 + $0x38] sm:$0xff]
    %v42 = vld [vmem:[%s0 + $0x40] sm:$0xff]
    %v43 = vld [vmem:[%s0 + $0x48] sm:$0xff]
    %v44 = vld [vmem:[%s0 + $0x50] sm:$0xff]
    %v45 = vld [vmem:[%s0 + $0x58] sm:$0xff]
    %v46 = vld [vmem:[%s0 + $0x60] sm:$0xff]
    %v47 = vld [vmem:[%s0 + $0x68] sm:$0xff]
    %v48 = vld [vmem:[%s0 + $0x70] sm:$0xff]
    %v49 = vld [vmem:[%s0 + $0x78] sm:$0xff]
    %v50 = vld [vmem:[%s0 + $0x80] sm:$0xff]
    %v51 = vld [vmem:[%s0 + $0x88] sm:$0xff]
    %v52 = vld [vmem:[%s0 + $0x90] sm:$0xff]
    %v53 = vld [vmem:[%s0 + $0x98] sm:$0xff]
    %v54 = vld [vmem:[%s0 + $0xa0] sm:$0xff]
    %v55 = vld [vmem:[%s0 + $0xa8] sm:$0xff]
    %v56 = vld [vmem:[%s0 + $0xb0] sm:$0xff]
    %v57 = vld [vmem:[%s0 + $0xb8] sm:$0xff]
    %v58 = vld [vmem:[%s0 + $0xc0] sm:$0xff]
    %v59 = vld [vmem:[%s0 + $0xc8] sm:$0xff]
    %v60 = vld [vmem:[%s0 + $0xd0] sm:$0xff]
    %v61 = vld [vmem:[%s0 + $0xd8] sm:$0xff]
    %v62 = vld [vmem:[%s0 + $0xe0] sm:$0xff]
    %v63 = vld [vmem:[%s0 + $0xe8] sm:$0xff]
    %v64 = vld [vmem:[%s0 + $0xf0] sm:$0xff]
    %v65 = vld [vmem:[%s0 + $0xf8] sm:$0xff]
    %v66 = vld [vmem:[%s0 + $0x100] sm:$0xff]
    %v67 = vld [vmem:[%s0 + $0x108] sm:$0xff]
    %v68 = vld [vmem:[%s0 + $0x110] sm:$0xff]
    %v69 = vld [vmem:[%s0 + $0x118] sm:$0xff]
    %v70 = vld [vmem:[%s0 + $0x120] sm:$0xff]
    %v71 = vld [vmem:[%s0 + $0x128] sm:$0xff]
    %v72 = vld [vmem:[%s0 + $0x130] sm:$0xff]
    %v73 = vld [vmem:[%s0 + $0x138] sm:$0xff]
    %v74 = vld [vmem:[%s0 + $0x140] sm:$0xff]
    %v75 = vld [vmem:[%s0 + $0x148] sm:$0xff]
    %v76 = vld [vmem:[%s0 + $0x150] sm:$0xff]
    %v77 = vld [vmem:[%s0 + $0x158] sm:$0xff]
    %v78 = vld [vmem:[%s0 + $0x160] sm:$0xff]
    %v79 = vld [vmem:[%s0 + $0x168] sm:$0xff]
    %v80 = vld [vmem:[%s0 + $0x170] sm:$0xff]
    %v81 = vld [vmem:[%s0 + $0x178] sm:$0xff]
    %v82 = vld [vmem:[%s0 + $0x180] sm:$0xff]
    %v83 = vld [vmem:[%s0 + $0x188] sm:$0xff]
    %v84 = vpack.c.bf16 %v36, %v34
    %v85 = vpack.c.bf16 %v37, %v35
    %v86 = vpack.c.bf16 %v40, %v38
    %v87 = vpack.c.bf16 %v41, %v39
    %v88 = vpack.c.bf16 %v44, %v42
    %v89 = vpack.c.bf16 %v45, %v43
    %v90 = vpack.c.bf16 %v48, %v46
    %v91 = vpack.c.bf16 %v49, %v47
    %v92 = vpack.c.bf16 %v52, %v50
    %v93 = vpack.c.bf16 %v53, %v51
    %v94 = vpack.c.bf16 %v56, %v54
    %v95 = vpack.c.bf16 %v57, %v55
    %v96 = vpack.c.bf16 %v60, %v58
    %v97 = vpack.c.bf16 %v61, %v59
    %v98 = vpack.c.bf16 %v64, %v62
    %v99 = vpack.c.bf16 %v65, %v63
    %v100 = vpack.c.bf16 %v68, %v66
    %v101 = vpack.c.bf16 %v69, %v67
    %v102 = vpack.c.bf16 %v72, %v70
    %v103 = vpack.c.bf16 %v73, %v71
    %v104 = vpack.c.bf16 %v76, %v74
    %v105 = vpack.c.bf16 %v77, %v75
    %v106 = vpack.c.bf16 %v80, %v78
    %v107 = vpack.c.bf16 %v81, %v79
    %v108 = vpack.c.bf16 %v82, %v82
    %v109 = vpack.c.bf16 %v83, %v83
    %v110 = vld [vmem:[%s1] sm:$0xff]
    %v111 = vld [vmem:[%s1 + $0x8] sm:$0xff]
    %v112 = vld [vmem:[%s1 + $0x10] sm:$0xff]
    %v113 = vld [vmem:[%s1 + $0x18] sm:$0xff]
    %v114 = vld [vmem:[%s2] sm:$0xff]
    %v115 = vld [vmem:[%s2 + $0x8] sm:$0xff]
    %v116 = vld [vmem:[%s2 + $0x10] sm:$0xff]
    %v117 = vld [vmem:[%s2 + $0x18] sm:$0xff]
    %119 = vset.pattern.permute.xlu0 0
    %120 = vperm.xlu0 %119, %v114
    %v121 = vpop.permute.xlu0 %120
    %124 = vset.pattern.permute.xlu0 0
    %125 = vperm.xlu0 %124, %v115
    %v126 = vpop.permute.xlu0 %125
    %129 = vset.pattern.permute.xlu0 0
    %130 = vperm.xlu0 %129, %v116
    %v131 = vpop.permute.xlu0 %130
    %134 = vset.pattern.permute.xlu0 0
    %135 = vperm.xlu0 %134, %v117
    %v136 = vpop.permute.xlu0 %135
    %v142 = vunpack.c.l.b16 %v110
    %v143 = vunpack.c.h.b16 %v110
    %v144 = vunpack.c.l.b16 %v111
    %v145 = vunpack.c.h.b16 %v111
    %v146 = vunpack.c.l.b16 %v112
    %v147 = vunpack.c.h.b16 %v112
    %v148 = vunpack.c.l.b16 %v113
    %v149 = vunpack.c.h.b16 %v113
    %v150 = vpack.c.b16 %v144, %v142
    %v151 = vpack.c.b16 %v145, %v143
    %v152 = vpack.c.b16 %v148, %v146
    %v153 = vpack.c.b16 %v149, %v147
    %vm156 = vcmask 130048
    %v158 = vsel %vm156, %v151, 0
    %v161 = vsel %vm156, %v153, 0
    %v164 = vsel %vm156, %v85, 0
    %v167 = vsel %vm156, %v87, 0
    %v170 = vsel %vm156, %v89, 0
    %v173 = vsel %vm156, %v91, 0
    %v176 = vsel %vm156, %v93, 0
    %v179 = vsel %vm156, %v95, 0
    %v182 = vsel %vm156, %v97, 0
    %v185 = vsel %vm156, %v99, 0
    %v188 = vsel %vm156, %v101, 0
    %v191 = vsel %vm156, %v103, 0
    %v194 = vsel %vm156, %v105, 0
    %v197 = vsel %vm156, %v107, 0
    %v200 = vsel %vm156, %v109, 0
    %202 = vmatpush.bf16.xpose.msra.mxu0 %v98
    %203 = vmatpush.bf16.xpose.msra.mxu0 %v96
    %204 = vmatpush.bf16.xpose.msra.mxu0 %v94
    %205 = vmatpush.bf16.xpose.msra.mxu0 %v92
    %206 = vmatpush.bf16.xpose.msra.mxu0 %v90
    %207 = vmatpush.bf16.xpose.msra.mxu0 %v88
    %208 = vmatpush.bf16.xpose.msra.mxu0 %v86
    %209 = vmatpush.bf16.xpose.msra.mxu0 %v84
    %210 = vmatmul.bf16.gmra.mxu0 %v150
    %v211 = vpop.f32.mrf.mxu0
    %v212 = vadd.f32 %v121, %v211
    %v213 = vpop.f32.mrf.mxu0
    %v214 = vadd.f32 %v126, %v213
    %215 = vmatmul.bf16.gmra.mxu0 %v152
    %v216 = vpop.f32.mrf.mxu0
    %v217 = vadd.f32 %v131, %v216
    %v218 = vpop.f32.mrf.mxu0
    %v219 = vadd.f32 %v136, %v218
    %220 = vdwg.mxu0
    %221 = vmatpush.bf16.xpose.msra.mxu0 %v185
    %222 = vmatpush.bf16.xpose.msra.mxu0 %v182
    %223 = vmatpush.bf16.xpose.msra.mxu0 %v179
    %224 = vmatpush.bf16.xpose.msra.mxu0 %v176
    %225 = vmatpush.bf16.xpose.msra.mxu0 %v173
    %226 = vmatpush.bf16.xpose.msra.mxu0 %v170
    %227 = vmatpush.bf16.xpose.msra.mxu0 %v167
    %228 = vmatpush.bf16.xpose.msra.mxu0 %v164
    %229 = vmatmul.bf16.gmra.mxu0 %v158
    %v230 = vpop.f32.mrf.mxu0
    %v231 = vadd.f32 %v212, %v230
    %v232 = vpop.f32.mrf.mxu0
    %v233 = vadd.f32 %v214, %v232
    %234 = vmatmul.bf16.gmra.mxu0 %v161
    %v235 = vpop.f32.mrf.mxu0
    %v236 = vadd.f32 %v217, %v235
    %v237 = vpop.f32.mrf.mxu0
    %v238 = vadd.f32 %v219, %v237
    %239 = vdwg.mxu0
    %240 = vmatpush.bf16.xpose.msra.mxu0 0
    %241 = vmatpush.bf16.xpose.msra.mxu0 0
    %242 = vmatpush.bf16.xpose.msra.mxu0 0
    %243 = vmatpush.bf16.xpose.msra.mxu0 %v108
    %244 = vmatpush.bf16.xpose.msra.mxu0 %v106
    %245 = vmatpush.bf16.xpose.msra.mxu0 %v104
    %246 = vmatpush.bf16.xpose.msra.mxu0 %v102
    %247 = vmatpush.bf16.xpose.msra.mxu0 %v100
    %248 = vmatmul.bf16.gmra.mxu0 %v150
    %v249 = vpop.f32.mrf.mxu0
    %v250 = vadd.f32 %v121, %v249
    %v251 = vpop.f32.mrf.mxu0
    %v252 = vadd.f32 %v126, %v251
    %253 = vmatmul.bf16.gmra.mxu0 %v152
    %v254 = vpop.f32.mrf.mxu0
    %v255 = vadd.f32 %v131, %v254
    %v256 = vpop.f32.mrf.mxu0
    %v257 = vadd.f32 %v136, %v256
    %258 = vdwg.mxu0
    %259 = vmatpush.bf16.xpose.msra.mxu0 0
    %260 = vmatpush.bf16.xpose.msra.mxu0 0
    %261 = vmatpush.bf16.xpose.msra.mxu0 0
    %262 = vmatpush.bf16.xpose.msra.mxu0 %v200
    %263 = vmatpush.bf16.xpose.msra.mxu0 %v197
    %264 = vmatpush.bf16.xpose.msra.mxu0 %v194
    %265 = vmatpush.bf16.xpose.msra.mxu0 %v191
    %266 = vmatpush.bf16.xpose.msra.mxu0 %v188
    %267 = vmatmul.bf16.gmra.mxu0 %v158
    %v268 = vpop.f32.mrf.mxu0
    %v269 = vadd.f32 %v250, %v268
    %v270 = vpop.f32.mrf.mxu0
    %v271 = vadd.f32 %v252, %v270
    %272 = vmatmul.bf16.gmra.mxu0 %v161
    %v273 = vpop.f32.mrf.mxu0
    %v274 = vadd.f32 %v255, %v273
    %v275 = vpop.f32.mrf.mxu0
    %v276 = vadd.f32 %v257, %v275
    %277 = vdwg.mxu0
    %v278 = vmax.f32 %v231, 0.0
    %v279 = vmax.f32 %v269, 0.0
    %v280 = vmax.f32 %v233, 0.0
    %v281 = vmax.f32 %v271, 0.0
    %v282 = vmax.f32 %v236, 0.0
    %v283 = vmax.f32 %v274, 0.0
    %v284 = vmax.f32 %v238, 0.0
    %v285 = vmax.f32 %v276, 0.0
    %v286 = vpack.c.bf16 %v280, %v278
    %v287 = vpack.c.bf16 %v281, %v279
    %v288 = vpack.c.bf16 %v284, %v282
    %v289 = vpack.c.bf16 %v285, %v283
    %v290 = vld [vmem:[%s3] sm:$0xf]
    %v291 = vld [vmem:[%s3 + $0x4] sm:$0xf]
    %v292 = vld [vmem:[%s3 + $0x8] sm:$0xf]
    %v293 = vld [vmem:[%s3 + $0xc] sm:$0xf]
    %v294 = vld [vmem:[%s3 + $0x10] sm:$0xf]
    %v295 = vld [vmem:[%s3 + $0x14] sm:$0xf]
    %v296 = vld [vmem:[%s3 + $0x18] sm:$0xf]
    %v297 = vld [vmem:[%s3 + $0x1c] sm:$0xf]
    %v298 = vld [vmem:[%s4] sm:$0xff]
    %v299 = vld [vmem:[%s4 + $0x8] sm:$0xff]
    %v300 = vld [vmem:[%s4 + $0x10] sm:$0xff]
    %v301 = vld [vmem:[%s4 + $0x18] sm:$0xff]
    %v302 = vld [vmem:[%s4 + $0x20] sm:$0xff]
    %v303 = vld [vmem:[%s4 + $0x28] sm:$0xff]
    %v304 = vld [vmem:[%s4 + $0x30] sm:$0xff]
    %v305 = vld [vmem:[%s4 + $0x38] sm:$0xff]
    %307 = vset.pattern.permute.xlu0 0
    %308 = vperm.xlu0 %307, %v298
    %v309 = vpop.permute.xlu0 %308
    %312 = vset.pattern.permute.xlu0 0
    %313 = vperm.xlu0 %312, %v299
    %v314 = vpop.permute.xlu0 %313
    %317 = vset.pattern.permute.xlu0 0
    %318 = vperm.xlu0 %317, %v300
    %v319 = vpop.permute.xlu0 %318
    %322 = vset.pattern.permute.xlu0 0
    %323 = vperm.xlu0 %322, %v301
    %v324 = vpop.permute.xlu0 %323
    %327 = vset.pattern.permute.xlu0 0
    %328 = vperm.xlu0 %327, %v302
    %v329 = vpop.permute.xlu0 %328
    %332 = vset.pattern.permute.xlu0 0
    %333 = vperm.xlu0 %332, %v303
    %v334 = vpop.permute.xlu0 %333
    %337 = vset.pattern.permute.xlu0 0
    %338 = vperm.xlu0 %337, %v304
    %v339 = vpop.permute.xlu0 %338
    %342 = vset.pattern.permute.xlu0 0
    %343 = vperm.xlu0 %342, %v305
    %v344 = vpop.permute.xlu0 %343
    %v354 = vunpack.c.l.b16 %v290
    %v355 = vunpack.c.l.b16 %v291
    %v356 = vunpack.c.l.b16 %v292
    %v357 = vunpack.c.l.b16 %v293
    %v358 = vunpack.c.l.b16 %v294
    %v359 = vunpack.c.l.b16 %v295
    %v360 = vunpack.c.l.b16 %v296
    %v361 = vunpack.c.l.b16 %v297
    %v362 = vpack.c.b16 %v355, %v354
    %v363 = vpack.c.b16 %v357, %v356
    %v364 = vpack.c.b16 %v359, %v358
    %v365 = vpack.c.b16 %v361, %v360
    %vm366 = vcmask 261120
    %v368 = vsel %vm366, %v362, 0
    %v371 = vsel %vm366, %v363, 0
    %v374 = vsel %vm366, %v364, 0
    %v377 = vsel %vm366, %v365, 0
    %379 = vmatpush.bf16.msra.mxu0 0
    %380 = vmatpush.bf16.msra.mxu0 0
    %381 = vmatpush.bf16.msra.mxu0 0
    %382 = vmatpush.bf16.msra.mxu0 0
    %383 = vmatpush.bf16.msra.mxu0 0
    %384 = vmatpush.bf16.msra.mxu0 0
    %385 = vmatpush.bf16.msra.mxu0 %v288
    %386 = vmatpush.bf16.msra.mxu0 %v286
    %387 = vmatmul.bf16.gmra.mxu0 %v368
    %v388 = vpop.f32.mrf.mxu0
    %v389 = vadd.f32 %v309, %v388
    %v390 = vpop.f32.mrf.mxu0
    %v391 = vadd.f32 %v314, %v390
    %392 = vmatmul.bf16.gmra.mxu0 %v371
    %v393 = vpop.f32.mrf.mxu0
    %v394 = vadd.f32 %v319, %v393
    %v395 = vpop.f32.mrf.mxu0
    %v396 = vadd.f32 %v324, %v395
    %397 = vmatmul.bf16.gmra.mxu0 %v374
    %v398 = vpop.f32.mrf.mxu0
    %v399 = vadd.f32 %v329, %v398
    %v400 = vpop.f32.mrf.mxu0
    %v401 = vadd.f32 %v334, %v400
    %402 = vmatmul.bf16.gmra.mxu0 %v377
    %v403 = vpop.f32.mrf.mxu0
    %v404 = vadd.f32 %v339, %v403
    %v405 = vpop.f32.mrf.mxu0
    %v406 = vadd.f32 %v344, %v405
    %407 = vdwg.mxu0
    %408 = vmatpush.bf16.msra.mxu0 0
    %409 = vmatpush.bf16.msra.mxu0 0
    %410 = vmatpush.bf16.msra.mxu0 0
    %411 = vmatpush.bf16.msra.mxu0 0
    %412 = vmatpush.bf16.msra.mxu0 0
    %413 = vmatpush.bf16.msra.mxu0 0
    %414 = vmatpush.bf16.msra.mxu0 %v289
    %415 = vmatpush.bf16.msra.mxu0 %v287
    %416 = vmatmul.bf16.gmra.mxu0 %v368
    %v417 = vpop.f32.mrf.mxu0
    %v418 = vadd.f32 %v309, %v417
    %v419 = vpop.f32.mrf.mxu0
    %v420 = vadd.f32 %v314, %v419
    %421 = vmatmul.bf16.gmra.mxu0 %v371
    %v422 = vpop.f32.mrf.mxu0
    %v423 = vadd.f32 %v319, %v422
    %v424 = vpop.f32.mrf.mxu0
    %v425 = vadd.f32 %v324, %v424
    %426 = vmatmul.bf16.gmra.mxu0 %v374
    %v427 = vpop.f32.mrf.mxu0
    %v428 = vadd.f32 %v329, %v427
    %v429 = vpop.f32.mrf.mxu0
    %v430 = vadd.f32 %v334, %v429
    %431 = vmatmul.bf16.gmra.mxu0 %v377
    %v432 = vpop.f32.mrf.mxu0
    %v433 = vadd.f32 %v339, %v432
    %v434 = vpop.f32.mrf.mxu0
    %v435 = vadd.f32 %v344, %v434
    %436 = vdwg.mxu0
    %v437 = vmax.f32 %v389, 0.0
    %v438 = vmax.f32 %v418, 0.0
    %v439 = vmax.f32 %v391, 0.0
    %v440 = vmax.f32 %v420, 0.0
    %v441 = vmax.f32 %v394, 0.0
    %v442 = vmax.f32 %v423, 0.0
    %v443 = vmax.f32 %v396, 0.0
    %v444 = vmax.f32 %v425, 0.0
    %v445 = vmax.f32 %v399, 0.0
    %v446 = vmax.f32 %v428, 0.0
    %v447 = vmax.f32 %v401, 0.0
    %v448 = vmax.f32 %v430, 0.0
    %v449 = vmax.f32 %v404, 0.0
    %v450 = vmax.f32 %v433, 0.0
    %v451 = vmax.f32 %v406, 0.0
    %v452 = vmax.f32 %v435, 0.0
    %v453 = vpack.c.bf16 %v439, %v437
    %v454 = vpack.c.bf16 %v440, %v438
    %v455 = vpack.c.bf16 %v443, %v441
    %v456 = vpack.c.bf16 %v444, %v442
    %v457 = vpack.c.bf16 %v447, %v445
    %v458 = vpack.c.bf16 %v448, %v446
    %v459 = vpack.c.bf16 %v451, %v449
    %v460 = vpack.c.bf16 %v452, %v450
    %v461 = vld [vmem:[%s5] sm:$0xf]
    %v462 = vld [vmem:[%s5 + $0x4] sm:$0xf]
    %v463 = vld [vmem:[%s5 + $0x8] sm:$0xf]
    %v464 = vld [vmem:[%s5 + $0xc] sm:$0xf]
    %v465 = vld [vmem:[%s5 + $0x10] sm:$0xf]
    %v466 = vld [vmem:[%s5 + $0x14] sm:$0xf]
    %v467 = vld [vmem:[%s5 + $0x18] sm:$0xf]
    %v468 = vld [vmem:[%s5 + $0x1c] sm:$0xf]
    %v469 = vld [vmem:[%s5 + $0x20] sm:$0xf]
    %v470 = vld [vmem:[%s5 + $0x24] sm:$0xf]
    %v471 = vld [vmem:[%s5 + $0x28] sm:$0xf]
    %v472 = vld [vmem:[%s5 + $0x2c] sm:$0xf]
    %v473 = vld [vmem:[%s5 + $0x30] sm:$0xf]
    %v474 = vld [vmem:[%s5 + $0x34] sm:$0xf]
    %v475 = vld [vmem:[%s5 + $0x38] sm:$0xf]
    %v476 = vld [vmem:[%s5 + $0x3c] sm:$0xf]
    %v477 = vld [vmem:[%s6] sm:$0xff]
    %v478 = vld [vmem:[%s6 + $0x8] sm:$0xff]
    %v479 = vld [vmem:[%s6 + $0x10] sm:$0xff]
    %v480 = vld [vmem:[%s6 + $0x18] sm:$0xff]
    %v481 = vld [vmem:[%s6 + $0x20] sm:$0xff]
    %v482 = vld [vmem:[%s6 + $0x28] sm:$0xff]
    %v483 = vld [vmem:[%s6 + $0x30] sm:$0xff]
    %v484 = vld [vmem:[%s6 + $0x38] sm:$0xff]
    %v485 = vld [vmem:[%s6 + $0x40] sm:$0xff]
    %v486 = vld [vmem:[%s6 + $0x48] sm:$0xff]
    %v487 = vld [vmem:[%s6 + $0x50] sm:$0xff]
    %v488 = vld [vmem:[%s6 + $0x58] sm:$0xff]
    %v489 = vld [vmem:[%s6 + $0x60] sm:$0xff]
    %v490 = vld [vmem:[%s6 + $0x68] sm:$0xff]
    %v491 = vld [vmem:[%s6 + $0x70] sm:$0xff]
    %v492 = vld [vmem:[%s6 + $0x78] sm:$0xff]
    %494 = vset.pattern.permute.xlu0 0
    %495 = vperm.xlu0 %494, %v477
    %v496 = vpop.permute.xlu0 %495
    %499 = vset.pattern.permute.xlu0 0
    %500 = vperm.xlu0 %499, %v478
    %v501 = vpop.permute.xlu0 %500
    %504 = vset.pattern.permute.xlu0 0
    %505 = vperm.xlu0 %504, %v479
    %v506 = vpop.permute.xlu0 %505
    %509 = vset.pattern.permute.xlu0 0
    %510 = vperm.xlu0 %509, %v480
    %v511 = vpop.permute.xlu0 %510
    %514 = vset.pattern.permute.xlu0 0
    %515 = vperm.xlu0 %514, %v481
    %v516 = vpop.permute.xlu0 %515
    %519 = vset.pattern.permute.xlu0 0
    %520 = vperm.xlu0 %519, %v482
    %v521 = vpop.permute.xlu0 %520
    %524 = vset.pattern.permute.xlu0 0
    %525 = vperm.xlu0 %524, %v483
    %v526 = vpop.permute.xlu0 %525
    %529 = vset.pattern.permute.xlu0 0
    %530 = vperm.xlu0 %529, %v484
    %v531 = vpop.permute.xlu0 %530
    %534 = vset.pattern.permute.xlu0 0
    %535 = vperm.xlu0 %534, %v485
    %v536 = vpop.permute.xlu0 %535
    %539 = vset.pattern.permute.xlu0 0
    %540 = vperm.xlu0 %539, %v486
    %v541 = vpop.permute.xlu0 %540
    %544 = vset.pattern.permute.xlu0 0
    %545 = vperm.xlu0 %544, %v487
    %v546 = vpop.permute.xlu0 %545
    %549 = vset.pattern.permute.xlu0 0
    %550 = vperm.xlu0 %549, %v488
    %v551 = vpop.permute.xlu0 %550
    %554 = vset.pattern.permute.xlu0 0
    %555 = vperm.xlu0 %554, %v489
    %v556 = vpop.permute.xlu0 %555
    %559 = vset.pattern.permute.xlu0 0
    %560 = vperm.xlu0 %559, %v490
    %v561 = vpop.permute.xlu0 %560
    %564 = vset.pattern.permute.xlu0 0
    %565 = vperm.xlu0 %564, %v491
    %v566 = vpop.permute.xlu0 %565
    %569 = vset.pattern.permute.xlu0 0
    %570 = vperm.xlu0 %569, %v492
    %v571 = vpop.permute.xlu0 %570
    %v589 = vunpack.c.l.b16 %v461
    %v590 = vunpack.c.l.b16 %v462
    %v591 = vunpack.c.l.b16 %v463
    %v592 = vunpack.c.l.b16 %v464
    %v593 = vunpack.c.l.b16 %v465
    %v594 = vunpack.c.l.b16 %v466
    %v595 = vunpack.c.l.b16 %v467
    %v596 = vunpack.c.l.b16 %v468
    %v597 = vunpack.c.l.b16 %v469
    %v598 = vunpack.c.l.b16 %v470
    %v599 = vunpack.c.l.b16 %v471
    %v600 = vunpack.c.l.b16 %v472
    %v601 = vunpack.c.l.b16 %v473
    %v602 = vunpack.c.l.b16 %v474
    %v603 = vunpack.c.l.b16 %v475
    %v604 = vunpack.c.l.b16 %v476
    %v605 = vpack.c.b16 %v590, %v589
    %v606 = vpack.c.b16 %v592, %v591
    %v607 = vpack.c.b16 %v594, %v593
    %v608 = vpack.c.b16 %v596, %v595
    %v609 = vpack.c.b16 %v598, %v597
    %v610 = vpack.c.b16 %v600, %v599
    %v611 = vpack.c.b16 %v602, %v601
    %v612 = vpack.c.b16 %v604, %v603
    %vm613 = vcmask 523264
    %v615 = vsel %vm613, %v605, 0
    %v618 = vsel %vm613, %v606, 0
    %v621 = vsel %vm613, %v607, 0
    %v624 = vsel %vm613, %v608, 0
    %v627 = vsel %vm613, %v609, 0
    %v630 = vsel %vm613, %v610, 0
    %v633 = vsel %vm613, %v611, 0
    %v636 = vsel %vm613, %v612, 0
    %638 = vmatpush.bf16.msra.mxu0 0
    %639 = vmatpush.bf16.msra.mxu0 0
    %640 = vmatpush.bf16.msra.mxu0 0
    %641 = vmatpush.bf16.msra.mxu0 0
    %642 = vmatpush.bf16.msra.mxu0 %v459
    %643 = vmatpush.bf16.msra.mxu0 %v457
    %644 = vmatpush.bf16.msra.mxu0 %v455
    %645 = vmatpush.bf16.msra.mxu0 %v453
    %646 = vmatmul.bf16.gmra.mxu0 %v615
    %v647 = vpop.f32.mrf.mxu0
    %v648 = vadd.f32 %v496, %v647
    %v649 = vpop.f32.mrf.mxu0
    %v650 = vadd.f32 %v501, %v649
    %651 = vmatmul.bf16.gmra.mxu0 %v618
    %v652 = vpop.f32.mrf.mxu0
    %v653 = vadd.f32 %v506, %v652
    %v654 = vpop.f32.mrf.mxu0
    %v655 = vadd.f32 %v511, %v654
    %656 = vmatmul.bf16.gmra.mxu0 %v621
    %v657 = vpop.f32.mrf.mxu0
    %v658 = vadd.f32 %v516, %v657
    %v659 = vpop.f32.mrf.mxu0
    %v660 = vadd.f32 %v521, %v659
    %661 = vmatmul.bf16.gmra.mxu0 %v624
    %v662 = vpop.f32.mrf.mxu0
    %v663 = vadd.f32 %v526, %v662
    %v664 = vpop.f32.mrf.mxu0
    %v665 = vadd.f32 %v531, %v664
    %666 = vmatmul.bf16.gmra.mxu0 %v627
    %v667 = vpop.f32.mrf.mxu0
    %v668 = vadd.f32 %v536, %v667
    %v669 = vpop.f32.mrf.mxu0
    %v670 = vadd.f32 %v541, %v669
    %671 = vmatmul.bf16.gmra.mxu0 %v630
    %v672 = vpop.f32.mrf.mxu0
    %v673 = vadd.f32 %v546, %v672
    %v674 = vpop.f32.mrf.mxu0
    %v675 = vadd.f32 %v551, %v674
    %676 = vmatmul.bf16.gmra.mxu0 %v633
    %v677 = vpop.f32.mrf.mxu0
    %v678 = vadd.f32 %v556, %v677
    %v679 = vpop.f32.mrf.mxu0
    %v680 = vadd.f32 %v561, %v679
    %681 = vmatmul.bf16.gmra.mxu0 %v636
    %v682 = vpop.f32.mrf.mxu0
    %v683 = vadd.f32 %v566, %v682
    %v684 = vpop.f32.mrf.mxu0
    %v685 = vadd.f32 %v571, %v684
    %686 = vdwg.mxu0
    %687 = vmatpush.bf16.msra.mxu0 0
    %688 = vmatpush.bf16.msra.mxu0 0
    %689 = vmatpush.bf16.msra.mxu0 0
    %690 = vmatpush.bf16.msra.mxu0 0
    %691 = vmatpush.bf16.msra.mxu0 %v460
    %692 = vmatpush.bf16.msra.mxu0 %v458
    %693 = vmatpush.bf16.msra.mxu0 %v456
    %694 = vmatpush.bf16.msra.mxu0 %v454
    %695 = vmatmul.bf16.gmra.mxu0 %v615
    %v696 = vpop.f32.mrf.mxu0
    %v697 = vadd.f32 %v496, %v696
    %v698 = vpop.f32.mrf.mxu0
    %v699 = vadd.f32 %v501, %v698
    %700 = vmatmul.bf16.gmra.mxu0 %v618
    %v701 = vpop.f32.mrf.mxu0
    %v702 = vadd.f32 %v506, %v701
    %v703 = vpop.f32.mrf.mxu0
    %v704 = vadd.f32 %v511, %v703
    %705 = vmatmul.bf16.gmra.mxu0 %v621
    %v706 = vpop.f32.mrf.mxu0
    %v707 = vadd.f32 %v516, %v706
    %v708 = vpop.f32.mrf.mxu0
    %v709 = vadd.f32 %v521, %v708
    %710 = vmatmul.bf16.gmra.mxu0 %v624
    %v711 = vpop.f32.mrf.mxu0
    %v712 = vadd.f32 %v526, %v711
    %v713 = vpop.f32.mrf.mxu0
    %v714 = vadd.f32 %v531, %v713
    %715 = vmatmul.bf16.gmra.mxu0 %v627
    %v716 = vpop.f32.mrf.mxu0
    %v717 = vadd.f32 %v536, %v716
    %v718 = vpop.f32.mrf.mxu0
    %v719 = vadd.f32 %v541, %v718
    %720 = vmatmul.bf16.gmra.mxu0 %v630
    %v721 = vpop.f32.mrf.mxu0
    %v722 = vadd.f32 %v546, %v721
    %v723 = vpop.f32.mrf.mxu0
    %v724 = vadd.f32 %v551, %v723
    %725 = vmatmul.bf16.gmra.mxu0 %v633
    %v726 = vpop.f32.mrf.mxu0
    %v727 = vadd.f32 %v556, %v726
    %v728 = vpop.f32.mrf.mxu0
    %v729 = vadd.f32 %v561, %v728
    %730 = vmatmul.bf16.gmra.mxu0 %v636
    %v731 = vpop.f32.mrf.mxu0
    %v732 = vadd.f32 %v566, %v731
    %v733 = vpop.f32.mrf.mxu0
    %v734 = vadd.f32 %v571, %v733
    %735 = vdwg.mxu0
    %v736 = vmax.f32 %v648, 0.0
    %v737 = vmax.f32 %v697, 0.0
    %v738 = vmax.f32 %v650, 0.0
    %v739 = vmax.f32 %v699, 0.0
    %v740 = vmax.f32 %v653, 0.0
    %v741 = vmax.f32 %v702, 0.0
    %v742 = vmax.f32 %v655, 0.0
    %v743 = vmax.f32 %v704, 0.0
    %v744 = vmax.f32 %v658, 0.0
    %v745 = vmax.f32 %v707, 0.0
    %v746 = vmax.f32 %v660, 0.0
    %v747 = vmax.f32 %v709, 0.0
    %v748 = vmax.f32 %v663, 0.0
    %v749 = vmax.f32 %v712, 0.0
    %v750 = vmax.f32 %v665, 0.0
    %v751 = vmax.f32 %v714, 0.0
    %v752 = vmax.f32 %v668, 0.0
    %v753 = vmax.f32 %v717, 0.0
    %v754 = vmax.f32 %v670, 0.0
    %v755 = vmax.f32 %v719, 0.0
    %v756 = vmax.f32 %v673, 0.0
    %v757 = vmax.f32 %v722, 0.0
    %v758 = vmax.f32 %v675, 0.0
    %v759 = vmax.f32 %v724, 0.0
    %v760 = vmax.f32 %v678, 0.0
    %v761 = vmax.f32 %v727, 0.0
    %v762 = vmax.f32 %v680, 0.0
    %v763 = vmax.f32 %v729, 0.0
    %v764 = vmax.f32 %v683, 0.0
    %v765 = vmax.f32 %v732, 0.0
    %v766 = vmax.f32 %v685, 0.0
    %v767 = vmax.f32 %v734, 0.0
    %v768 = vpack.c.bf16 %v738, %v736
    %v769 = vpack.c.bf16 %v739, %v737
    %v770 = vpack.c.bf16 %v742, %v740
    %v771 = vpack.c.bf16 %v743, %v741
    %v772 = vpack.c.bf16 %v746, %v744
    %v773 = vpack.c.bf16 %v747, %v745
    %v774 = vpack.c.bf16 %v750, %v748
    %v775 = vpack.c.bf16 %v751, %v749
    %v776 = vpack.c.bf16 %v754, %v752
    %v777 = vpack.c.bf16 %v755, %v753
    %v778 = vpack.c.bf16 %v758, %v756
    %v779 = vpack.c.bf16 %v759, %v757
    %v780 = vpack.c.bf16 %v762, %v760
    %v781 = vpack.c.bf16 %v763, %v761
    %v782 = vpack.c.bf16 %v766, %v764
    %v783 = vpack.c.bf16 %v767, %v765
    %v784 = vld [vmem:[%s7] sm:$0xf]
    %v785 = vld [vmem:[%s7 + $0x4] sm:$0xf]
    %v786 = vld [vmem:[%s8] sm:$0xff]
    %v787 = vld [vmem:[%s8 + $0x8] sm:$0x7f]
    %789 = vset.pattern.permute.xlu0 0
    %790 = vperm.xlu0 %789, %v786
    %v791 = vpop.permute.xlu0 %790
    %794 = vset.pattern.permute.xlu0 0
    %795 = vperm.xlu0 %794, %v787
    %v796 = vpop.permute.xlu0 %795
    %v800 = vunpack.c.l.b16 %v784
    %v801 = vunpack.c.l.b16 %v785
    %v802 = vpack.c.b16 %v801, %v800
    %804 = vmatpush.bf16.msra.mxu0 %v782
    %805 = vmatpush.bf16.msra.mxu0 %v780
    %806 = vmatpush.bf16.msra.mxu0 %v778
    %807 = vmatpush.bf16.msra.mxu0 %v776
    %808 = vmatpush.bf16.msra.mxu0 %v774
    %809 = vmatpush.bf16.msra.mxu0 %v772
    %810 = vmatpush.bf16.msra.mxu0 %v770
    %811 = vmatpush.bf16.msra.mxu0 %v768
    %812 = vmatmul.bf16.gmra.mxu0 %v802
    %v813 = vpop.f32.mrf.mxu0
    %v814 = vadd.f32 %v791, %v813
    %v815 = vpop.f32.mrf.mxu0
    %v816 = vadd.f32 %v796, %v815
    %817 = vdwg.mxu0
    %818 = vmatpush.bf16.msra.mxu0 %v783
    %819 = vmatpush.bf16.msra.mxu0 %v781
    %820 = vmatpush.bf16.msra.mxu0 %v779
    %821 = vmatpush.bf16.msra.mxu0 %v777
    %822 = vmatpush.bf16.msra.mxu0 %v775
    %823 = vmatpush.bf16.msra.mxu0 %v773
    %824 = vmatpush.bf16.msra.mxu0 %v771
    %825 = vmatpush.bf16.msra.mxu0 %v769
    %826 = vmatmul.bf16.gmra.mxu0 %v802
    %v827 = vpop.f32.mrf.mxu0
    %v828 = vadd.f32 %v791, %v827
    %v829 = vpop.f32.mrf.mxu0
    %v830 = vadd.f32 %v796, %v829
    %831 = vdwg.mxu0
    %832 = vst [vmem:[#allocation2] sm:$0xff] %v814
    %vm833 = vcmask 588800
    %834 = vst.msk [vmem:[#allocation2 + $0x8] sm:$0xff] %vm833, %v828
    %835 = vst [vmem:[#allocation2 + $0x10] sm:$0x7f] %v816
    %vm836 = vcmask 587776
    %837 = vst.msk [vmem:[#allocation2 + $0x18] sm:$0x7f] %vm836, %v830
    // Predicated region
    $region38: #{classifier_forward.1} parent=1 // pred_check
      _
    $region39: #{classifier_forward.1} parent=1 // pred_check_branch
      %839 = sbr.rel (0) target = $region41
    $region40: #{classifier_forward.1} parent=1 // pred_region
      %841 = vsyncadd [#allocation3], 0
      %s842 = sshll.u32 [#allocation2], 4
      %s843 = int_to_ptr.vmem [resolvable:$true] %s842
      %s844 = sshll.u32 %s9, 4
      %s845 = int_to_ptr.hbm [resolvable:$true] %s844
      %850 = dma.vmem_to_hbm [thread:$0]  %s843, 512, %s845, [#allocation3], 256, 256, 16
    $region41: #{classifier_forward.1} parent=1 // pred_fallthru
      _
    // Predicated region
    $region42: #{classifier_forward.1} parent=1 // pred_check
      _
    $region43: #{classifier_forward.1} parent=1 // pred_check_branch
      %852 = sbr.rel (0) target = $region45
    $region44: #{classifier_forward.1} parent=1 // pred_region
      %854 = dma.done [#allocation3], 512
    $region45: #{classifier_forward.1} parent=1 // pred_fallthru
      _
    %855 = vsyncpa [#allocation3], 1

</llo_original>
